<compile_context>
chip_gen: v7x
topology: tpu7x:2x2x1
jax: 0.10.0
libtpu: 0.0.40
codegen_flags: <defaults>
</compile_context>

<pallas_src>
import jax
import jax.numpy as jnp
from jax.experimental import pallas as pl
from jax.experimental.pallas import tpu as pltpu

# ---- dimensions implied by the module's forward ---------------------------
META_IN, GRAPH_IN, PCA_IN = 4, 2, 10
TOTAL_IN = META_IN + GRAPH_IN + PCA_IN        # 16
META_E, GRAPH_E, PCA_E = 16, 16, 64
GLOBAL_E = META_E + GRAPH_E + PCA_E           # 96
IMG_ZEROS = 128                               # torch.zeros(B, 128) branch
FC_IN = IMG_ZEROS + GLOBAL_E                  # 224
FC_HID = 128
FC_OUT = 1


def global_only_kernel(xT_ref, whT_ref, bhT_ref, w1T_ref, b1T_ref,
                       w2_ref, b2_ref, o_ref):
    """One batch tile, batch-on-lanes layout.

    xT_ref : (16, TB)  bf16  transposed input tile (batch on the 128-lane axis)
    whT_ref: (96, 16)  bf16  packed block-diagonal head weight, transposed
    bhT_ref: (96, 1)   f32   packed head bias (column)
    w1T_ref: (128, 96) bf16  fc1 weight, global slice only, transposed
    b1T_ref: (128, 1)  f32   fc1 bias (column)
    w2_ref : (128, 1)  f32   fc2 weight column
    b2_ref : (1,)      f32   fc2 bias scalar (SMEM)
    o_ref  : (1, TB)   f32   lane-dense output row
    """
    xT = xT_ref[...]                                               # (16, TB)

    # Fused heads (meta | graph | pca): one K=16 MXU dot, f32 accumulation.
    g = jnp.dot(whT_ref[...], xT, preferred_element_type=jnp.float32)
    g = jnp.maximum(g + bhT_ref[...], 0.0)                         # (96, TB) f32

    # fc1 on cat([zeros(128), g]): zeros block elided -> one K=96 MXU dot.
    h = jnp.dot(w1T_ref[...], g.astype(w1T_ref.dtype),
                preferred_element_type=jnp.float32)
    h = jnp.maximum(h + b1T_ref[...], 0.0)                         # (128, TB) f32

    # fc2 (128 -> 1): VPU multiply + cross-sublane (XLU) reduce; frees the MXU
    # and keeps the stored slab lane-dense.
    o_ref[...] = jnp.sum(h * w2_ref[...], axis=0, keepdims=True) + b2_ref[0]


def pack_params(params):
    """One-time wrapper-side packing of the (in, out)-layout parameters."""
    # Block-diagonal head weight: rows 0:4 -> cols 0:16, rows 4:6 -> 16:32,
    # rows 6:16 -> 32:96.  x[:, :16] @ wh == cat([meta, graph, pca] pre-acts).
    wh = jnp.zeros((TOTAL_IN, GLOBAL_E), jnp.float32)
    wh = wh.at[0:META_IN, 0:META_E].set(params["meta_w"])
    wh = wh.at[META_IN:META_IN + GRAPH_IN,
               META_E:META_E + GRAPH_E].set(params["graph_w"])
    wh = wh.at[META_IN + GRAPH_IN:, META_E + GRAPH_E:].set(params["pca_w"])
    bh = jnp.concatenate(
        [params["meta_b"], params["graph_b"], params["pca_b"]], axis=1)   # (1, 96)

    w1 = params["fc1_w"][IMG_ZEROS:, :]           # (96, 128): zeros block elided

    return {
        "whT": wh.T.astype(jnp.bfloat16),                      # (96, 16)
        "bhT": bh.T.astype(jnp.float32),                       # (96, 1)
        "w1T": w1.T.astype(jnp.bfloat16),                      # (128, 96)
        "b1T": params["fc1_b"].T.astype(jnp.float32),          # (128, 1)
        "w2":  params["fc2_w"].astype(jnp.float32),            # (128, 1)
        "b2":  params["fc2_b"].reshape((1,)).astype(jnp.float32),   # (1,)
    }


def global_only_forward(global_feats, packed, *, tb=512):
    """global_feats: (B, 16) f32.  Returns (B, 1) f32."""
    B = global_feats.shape[0]
    bp = pl.cdiv(B, tb) * tb                      # pad batch to a tile multiple
    grid = (bp // tb,)

    xT = global_feats.T.astype(jnp.bfloat16)      # batch-on-lanes, bf16 operand
    if bp != B:
        xT = jnp.pad(xT, ((0, 0), (0, bp - B)))   # zero-pad; extra cols sliced off

    # VMEM budget from the tile math (double-buffered x/out tiles + resident
    # weights + f32 intermediates + compiler headroom).  ~6 MiB at tb=512 --
    # comfortably inside v7x's 64 MiB as well as v5e/v6e's 128 MiB.
    vmem_bytes = int(2 * TOTAL_IN * tb * 2            # bf16 x^T tiles (x2 buffers)
                     + 2 * tb * 4                     # f32 out tiles  (x2 buffers)
                     + (256 << 10)                    # padded resident weights/biases
                     + (GLOBAL_E + FC_HID) * tb * 4   # g / h intermediates
                     + (8 << 20))                     # compiler scratch headroom

    def resident(shape):
        # weights/biases: constant block index -> stay VMEM-resident, no re-DMA
        return pl.BlockSpec(shape, lambda i: (0, 0))

    outT = pl.pallas_call(
        global_only_kernel,
        out_shape=jax.ShapeDtypeStruct((1, bp), jnp.float32),
        grid_spec=pltpu.PrefetchScalarGridSpec(
            num_scalar_prefetch=0,
            grid=grid,
            in_specs=[
                pl.BlockSpec((TOTAL_IN, tb), lambda i: (0, i)),     # x^T batch tile
                resident((GLOBAL_E, TOTAL_IN)),                     # whT
                resident((GLOBAL_E, 1)),                            # bhT
                resident((FC_HID, GLOBAL_E)),                       # w1T
                resident((FC_HID, 1)),                              # b1T
                resident((FC_HID, 1)),                              # w2
                pl.BlockSpec(memory_space=pltpu.MemorySpace.SMEM),  # b2 scalar
            ],
            out_specs=pl.BlockSpec((1, tb), lambda i: (0, i)),      # lane-dense row
        ),
        compiler_params=pltpu.CompilerParams(
            dimension_semantics=("parallel",),        # megacore batch split on v7x
            vmem_limit_bytes=vmem_bytes),
    )(xT, packed["whT"], packed["bhT"], packed["w1T"], packed["b1T"],
      packed["w2"], packed["b2"])

    return outT[:, :B].T                              # (B, 1)


def init_params(key):
    ks = jax.random.split(key, 10)
    scale = 0.1
    return {
        "meta_w": scale * jax.random.normal(ks[0], (META_IN, META_E), jnp.float32),
        "meta_b": scale * jax.random.normal(ks[1], (1, META_E), jnp.float32),
        "graph_w": scale * jax.random.normal(ks[2], (GRAPH_IN, GRAPH_E), jnp.float32),
        "graph_b": scale * jax.random.normal(ks[3], (1, GRAPH_E), jnp.float32),
        "pca_w": scale * jax.random.normal(ks[4], (PCA_IN, PCA_E), jnp.float32),
        "pca_b": scale * jax.random.normal(ks[5], (1, PCA_E), jnp.float32),
        "fc1_w": scale * jax.random.normal(ks[6], (FC_IN, FC_HID), jnp.float32),
        "fc1_b": scale * jax.random.normal(ks[7], (1, FC_HID), jnp.float32),
        "fc2_w": scale * jax.random.normal(ks[8], (FC_HID, FC_OUT), jnp.float32),
        "fc2_b": scale * jax.random.normal(ks[9], (1, FC_OUT), jnp.float32),
    }


def reference_forward(x, p):
    """Literal f32 transcription of the PyTorch forward (explicit zeros cat)."""
    relu = lambda v: jnp.maximum(v, 0.0)
    meta = relu(x[:, 0:4] @ p["meta_w"] + p["meta_b"])
    graph = relu(x[:, 4:6] @ p["graph_w"] + p["graph_b"])
    pca = relu(x[:, 6:] @ p["pca_w"] + p["pca_b"])
    global_embed = jnp.concatenate([meta, graph, pca], axis=1)
    z = jnp.concatenate([jnp.zeros((x.shape[0], IMG_ZEROS), jnp.float32),
                         global_embed], axis=1)
    h = relu(z @ p["fc1_w"] + p["fc1_b"])
    return h @ p["fc2_w"] + p["fc2_b"]


if __name__ == "__main__":
    key = jax.random.PRNGKey(0)
    k_x, k_p = jax.random.split(key)

    B = 8
    global_feats = jax.random.normal(k_x, (B, TOTAL_IN), jnp.float32)   # (8, 16)
    params = init_params(k_p)
    packed = pack_params(params)

    out = global_only_forward(global_feats, packed)
    out = jax.block_until_ready(out)

    ref = reference_forward(global_feats, params)
    assert out.shape == (B, FC_OUT)
    # bf16 MXU operands with f32 accumulation: loosen tolerance vs f32 reference.
    assert jnp.allclose(out, ref, atol=2e-2, rtol=2e-2), (
        f"mismatch vs reference: max abs diff = {jnp.max(jnp.abs(out - ref))}")

    print("KERNEL_OK")
</pallas_src>

<mosaic_0001>
module attributes {stable_mosaic.version = 11 : i64} {
  func.func @global_only_kernel(%arg0: i32, %arg1: memref<16x512xbf16, #tpu.memory_space<vmem>>, %arg2: memref<96x16xbf16, #tpu.memory_space<vmem>>, %arg3: memref<96x1xf32, #tpu.memory_space<vmem>>, %arg4: memref<128x96xbf16, #tpu.memory_space<vmem>>, %arg5: memref<128x1xf32, #tpu.memory_space<vmem>>, %arg6: memref<128x1xf32, #tpu.memory_space<vmem>>, %arg7: memref<1xf32, #tpu.memory_space<smem>>, %arg8: memref<1x512xf32, #tpu.memory_space<vmem>>) attributes {dimension_semantics = [#tpu.dimension_semantics<parallel>], iteration_bounds = array<i64: 1>, scalar_prefetch = 0 : i64, scratch_operands = 0 : i64, tpu.core_type = #tpu.core_type<tc>, window_params = [{transform_indices = @transform_0, window_bounds = array<i64: 16, 512>}, {pipeline_mode = #tpu.pipeline_mode<synchronous>, transform_indices = @transform_1, window_bounds = array<i64: 96, 16>}, {pipeline_mode = #tpu.pipeline_mode<synchronous>, transform_indices = @transform_2, window_bounds = array<i64: 96, 1>}, {pipeline_mode = #tpu.pipeline_mode<synchronous>, transform_indices = @transform_3, window_bounds = array<i64: 128, 96>}, {pipeline_mode = #tpu.pipeline_mode<synchronous>, transform_indices = @transform_4, window_bounds = array<i64: 128, 1>}, {pipeline_mode = #tpu.pipeline_mode<synchronous>, transform_indices = @transform_5, window_bounds = array<i64: 128, 1>}, {transform_indices = @transform_6, window_bounds = array<i64: 1>}, {transform_indices = @transform_7, window_bounds = array<i64: 1, 512>}]} {
    %c0 = arith.constant 0 : index
    %c0_0 = arith.constant 0 : index
    %0 = vector.load %arg1[%c0, %c0_0] : memref<16x512xbf16, #tpu.memory_space<vmem>>, vector<16x512xbf16>
    %c0_1 = arith.constant 0 : index
    %c0_2 = arith.constant 0 : index
    %1 = vector.load %arg2[%c0_1, %c0_2] : memref<96x16xbf16, #tpu.memory_space<vmem>>, vector<96x16xbf16>
    %cst = arith.constant dense<0.000000e+00> : vector<96x512xf32>
    %2 = tpu.matmul %1, %0, %cst {dimension_numbers = #tpu.dot_dimension_numbers<[1], [0], [0], [1], [0, 0, 1, 1], [], []>} : vector<96x16xbf16>, vector<16x512xbf16>, vector<96x512xf32> -> vector<96x512xf32>
    %c0_3 = arith.constant 0 : index
    %c0_4 = arith.constant 0 : index
    %3 = vector.load %arg3[%c0_3, %c0_4] : memref<96x1xf32, #tpu.memory_space<vmem>>, vector<96x1xf32>
    %4 = vector.broadcast %3 : vector<96x1xf32> to vector<96x512xf32>
    %5 = arith.addf %2, %4 : vector<96x512xf32>
    %cst_5 = arith.constant 0.000000e+00 : f32
    %6 = vector.broadcast %cst_5 : f32 to vector<96x512xf32>
    %7 = arith.maximumf %5, %6 : vector<96x512xf32>
    %c0_6 = arith.constant 0 : index
    %c0_7 = arith.constant 0 : index
    %8 = vector.load %arg4[%c0_6, %c0_7] : memref<128x96xbf16, #tpu.memory_space<vmem>>, vector<128x96xbf16>
    %9 = arith.truncf %7 : vector<96x512xf32> to vector<96x512xbf16>
    %cst_8 = arith.constant dense<0.000000e+00> : vector<128x512xf32>
    %10 = tpu.matmul %8, %9, %cst_8 {dimension_numbers = #tpu.dot_dimension_numbers<[1], [0], [0], [1], [0, 0, 1, 1], [], []>} : vector<128x96xbf16>, vector<96x512xbf16>, vector<128x512xf32> -> vector<128x512xf32>
    %c0_9 = arith.constant 0 : index
    %c0_10 = arith.constant 0 : index
    %11 = vector.load %arg5[%c0_9, %c0_10] : memref<128x1xf32, #tpu.memory_space<vmem>>, vector<128x1xf32>
    %12 = vector.broadcast %11 : vector<128x1xf32> to vector<128x512xf32>
    %13 = arith.addf %10, %12 : vector<128x512xf32>
    %cst_11 = arith.constant 0.000000e+00 : f32
    %14 = vector.broadcast %cst_11 : f32 to vector<128x512xf32>
    %15 = arith.maximumf %13, %14 : vector<128x512xf32>
    %c0_12 = arith.constant 0 : index
    %c0_13 = arith.constant 0 : index
    %16 = vector.load %arg6[%c0_12, %c0_13] : memref<128x1xf32, #tpu.memory_space<vmem>>, vector<128x1xf32>
    %17 = vector.broadcast %16 : vector<128x1xf32> to vector<128x512xf32>
    %18 = arith.mulf %15, %17 : vector<128x512xf32>
    %cst_14 = arith.constant dense<0.000000e+00> : vector<512xf32>
    %19 = vector.multi_reduction <add>, %18, %cst_14 [0] : vector<128x512xf32> to vector<512xf32>
    %20 = vector.shape_cast %19 : vector<512xf32> to vector<1x512xf32>
    %c0_15 = arith.constant 0 : index
    %21 = memref.load %arg7[%c0_15] : memref<1xf32, #tpu.memory_space<smem>>
    %22 = vector.broadcast %21 : f32 to vector<1x512xf32>
    %23 = arith.addf %20, %22 : vector<1x512xf32>
    %c0_16 = arith.constant 0 : index
    %c0_17 = arith.constant 0 : index
    %24 = vector.load %arg8[%c0_16, %c0_17] : memref<1x512xf32, #tpu.memory_space<vmem>>, vector<1x512xf32>
    tpu.vector_store %arg8[%c0_16, %c0_17], %23 {strides = array<i32>} : memref<1x512xf32, #tpu.memory_space<vmem>>, vector<1x512xf32>,
    return
  }
  func.func @transform_0(%arg0: i32) -> (i32, i32) {
    %c0_i32 = arith.constant 0 : i32
    %c0_i32_0 = arith.constant 0 : i32
    return %c0_i32, %arg0 : i32, i32
  }
  func.func @transform_1(%arg0: i32) -> (i32, i32) {
    %c0_i32 = arith.constant 0 : i32
    %c0_i32_0 = arith.constant 0 : i32
    %c0_i32_1 = arith.constant 0 : i32
    return %c0_i32, %c0_i32_0 : i32, i32
  }
  func.func @transform_2(%arg0: i32) -> (i32, i32) {
    %c0_i32 = arith.constant 0 : i32
    %c0_i32_0 = arith.constant 0 : i32
    %c0_i32_1 = arith.constant 0 : i32
    return %c0_i32, %c0_i32_0 : i32, i32
  }
  func.func @transform_3(%arg0: i32) -> (i32, i32) {
    %c0_i32 = arith.constant 0 : i32
    %c0_i32_0 = arith.constant 0 : i32
    %c0_i32_1 = arith.constant 0 : i32
    return %c0_i32, %c0_i32_0 : i32, i32
  }
  func.func @transform_4(%arg0: i32) -> (i32, i32) {
    %c0_i32 = arith.constant 0 : i32
    %c0_i32_0 = arith.constant 0 : i32
    %c0_i32_1 = arith.constant 0 : i32
    return %c0_i32, %c0_i32_0 : i32, i32
  }
  func.func @transform_5(%arg0: i32) -> (i32, i32) {
    %c0_i32 = arith.constant 0 : i32
    %c0_i32_0 = arith.constant 0 : i32
    %c0_i32_1 = arith.constant 0 : i32
    return %c0_i32, %c0_i32_0 : i32, i32
  }
  func.func @transform_6(%arg0: i32) -> i32 {
    %c0_i32 = arith.constant 0 : i32
    %c0_i32_0 = arith.constant 0 : i32
    return %c0_i32 : i32
  }
  func.func @transform_7(%arg0: i32) -> (i32, i32) {
    %c0_i32 = arith.constant 0 : i32
    %c0_i32_0 = arith.constant 0 : i32
    return %c0_i32, %arg0 : i32, i32
  }
}

</mosaic_0001>

<llo_original>
// kernel: tpu_custom_call.1
$region0: #{tpu_custom_call.1}
  #allocation0 [shape = 'u32[]', space=smem, size = 0x4, offset = 0x4, fixed_abs, tag = 'smem constant byte address 0x4 - core index']
  #allocation1 [shape = 'u32[144,128]{1,0:T(1,128)}', space=vmem, size = 0x12000, scoped, tag = 'internal scratch']
  #allocation2 [shape = 'f32[1]{0:T(128)S(6)}', space=smem, size = 0x200, scoped, tag = 'scoped memory for tpu_custom_call.1']
  %s0 = inlined_call_operand.vmem [shape: bf16[16,512], index: 0, kind: input, shape index: {}]
  %s1 = inlined_call_operand.vmem [shape: bf16[96,16], index: 1, kind: input, shape index: {}]
  %s2 = inlined_call_operand.vmem [shape: f32[96,1], index: 2, kind: input, shape index: {}]
  %s3 = inlined_call_operand.vmem [shape: bf16[128,96], index: 3, kind: input, shape index: {}]
  %s4 = inlined_call_operand.vmem [shape: f32[128,1], index: 4, kind: input, shape index: {}]
  %s5 = inlined_call_operand.vmem [shape: f32[128,1], index: 5, kind: input, shape index: {}]
  %s6 = inlined_call_operand.<no memory space> [shape: f32[1], index: 6, kind: input, shape index: {}]
  %s7 = inlined_call_operand.hbm [shape: f32[1,512], index: 7, kind: output, shape index: {}]
  %s8 = sld [smem:[#allocation0]]
  $region38: #{tpu_custom_call.1} parent=0
    _
  %s10 = ssub.s32 1, %s8
  %s11 = scalar_select 0, %s10, %s8
  %12 = sst [smem:[#allocation2]] %s6
  $region1: #{tpu_custom_call.1} parent=0
    #allocation3 [shape = 'u8[2048]{0}', space=vmem, size = 0x800, scoped, tag = 'output window, operand 0, single buffered']
    #allocation4 [shape = 's32[1]{0}', space=sflag, size = 0x4, scoped, tag = 'scoped memory for tpu_custom_call.1']
    %13 = vsyncpa [#allocation4], 0
    // Predicated region
    $region2: #{tpu_custom_call.1} parent=1 // pred_check
      _
    $region3: #{tpu_custom_call.1} parent=1 // pred_check_branch
      %15 = sbr.rel (0) target = $region5
    $region4: #{tpu_custom_call.1} parent=1 // pred_region
      _
    $region5: #{tpu_custom_call.1} parent=1 // pred_fallthru
      _
    // Predicated region
    $region6: #{tpu_custom_call.1} parent=1 // pred_check
      _
    $region7: #{tpu_custom_call.1} parent=1 // pred_check_branch
      %17 = sbr.rel (0) target = $region9
    $region8: #{tpu_custom_call.1} parent=1 // pred_region
      _
    $region9: #{tpu_custom_call.1} parent=1 // pred_fallthru
      _
    // Predicated region
    $region10: #{tpu_custom_call.1} parent=1 // pred_check
      _
    $region11: #{tpu_custom_call.1} parent=1 // pred_check_branch
      %19 = sbr.rel (0) target = $region13
    $region12: #{tpu_custom_call.1} parent=1 // pred_region
      _
    $region13: #{tpu_custom_call.1} parent=1 // pred_fallthru
      _
    // Predicated region
    $region14: #{tpu_custom_call.1} parent=1 // pred_check
      _
    $region15: #{tpu_custom_call.1} parent=1 // pred_check_branch
      %21 = sbr.rel (0) target = $region17
    $region16: #{tpu_custom_call.1} parent=1 // pred_region
      _
    $region17: #{tpu_custom_call.1} parent=1 // pred_fallthru
      _
    // Predicated region
    $region18: #{tpu_custom_call.1} parent=1 // pred_check
      _
    $region19: #{tpu_custom_call.1} parent=1 // pred_check_branch
      %23 = sbr.rel (0) target = $region21
    $region20: #{tpu_custom_call.1} parent=1 // pred_region
      _
    $region21: #{tpu_custom_call.1} parent=1 // pred_fallthru
      _
    // Predicated region
    $region22: #{tpu_custom_call.1} parent=1 // pred_check
      _
    $region23: #{tpu_custom_call.1} parent=1 // pred_check_branch
      %25 = sbr.rel (0) target = $region25
    $region24: #{tpu_custom_call.1} parent=1 // pred_region
      _
    $region25: #{tpu_custom_call.1} parent=1 // pred_fallthru
      _
    // Predicated region
    $region26: #{tpu_custom_call.1} parent=1 // pred_check
      _
    $region27: #{tpu_custom_call.1} parent=1 // pred_check_branch
      %27 = sbr.rel (0) target = $region29
    $region28: #{tpu_custom_call.1} parent=1 // pred_region
      _
    $region29: #{tpu_custom_call.1} parent=1 // pred_fallthru
      _
    %v29 = vld [vmem:[%s0] sm:$0xff]
    %v30 = vld [vmem:[%s0 + $0x8] sm:$0xff]
    %v31 = vld [vmem:[%s0 + $0x10] sm:$0xff]
    %v32 = vld [vmem:[%s0 + $0x18] sm:$0xff]
    %v33 = vld [vmem:[%s1] sm:$0xf]
    %v34 = vld [vmem:[%s1 + $0x4] sm:$0xf]
    %v35 = vld [vmem:[%s1 + $0x8] sm:$0xf]
    %v36 = vld [vmem:[%s1 + $0xc] sm:$0xf]
    %v37 = vld [vmem:[%s1 + $0x10] sm:$0xf]
    %v38 = vld [vmem:[%s1 + $0x14] sm:$0xf]
    %v39 = vld [vmem:[%s1 + $0x18] sm:$0xf]
    %v40 = vld [vmem:[%s1 + $0x1c] sm:$0xf]
    %v41 = vld [vmem:[%s1 + $0x20] sm:$0xf]
    %v42 = vld [vmem:[%s1 + $0x24] sm:$0xf]
    %v43 = vld [vmem:[%s1 + $0x28] sm:$0xf]
    %v44 = vld [vmem:[%s1 + $0x2c] sm:$0xf]
    %v45 = vld [vmem:[%s2] sm:$0xff]
    %v46 = vld [vmem:[%s2 + $0x8] sm:$0xff]
    %v47 = vld [vmem:[%s2 + $0x10] sm:$0xff]
    %v48 = vld [vmem:[%s2 + $0x18] sm:$0xff]
    %v49 = vld [vmem:[%s2 + $0x20] sm:$0xff]
    %v50 = vld [vmem:[%s2 + $0x28] sm:$0xff]
    %v51 = vld [vmem:[%s2 + $0x30] sm:$0xff]
    %v52 = vld [vmem:[%s2 + $0x38] sm:$0xff]
    %v53 = vld [vmem:[%s2 + $0x40] sm:$0xff]
    %v54 = vld [vmem:[%s2 + $0x48] sm:$0xff]
    %v55 = vld [vmem:[%s2 + $0x50] sm:$0xff]
    %v56 = vld [vmem:[%s2 + $0x58] sm:$0xff]
    %58 = vset.pattern.permute.xlu0 0
    %59 = vperm.xlu0 %58, %v45
    %v60 = vpop.permute.xlu0 %59
    %63 = vset.pattern.permute.xlu0 0
    %64 = vperm.xlu0 %63, %v46
    %v65 = vpop.permute.xlu0 %64
    %68 = vset.pattern.permute.xlu0 0
    %69 = vperm.xlu0 %68, %v47
    %v70 = vpop.permute.xlu0 %69
    %73 = vset.pattern.permute.xlu0 0
    %74 = vperm.xlu0 %73, %v48
    %v75 = vpop.permute.xlu0 %74
    %78 = vset.pattern.permute.xlu0 0
    %79 = vperm.xlu0 %78, %v49
    %v80 = vpop.permute.xlu0 %79
    %83 = vset.pattern.permute.xlu0 0
    %84 = vperm.xlu0 %83, %v50
    %v85 = vpop.permute.xlu0 %84
    %88 = vset.pattern.permute.xlu0 0
    %89 = vperm.xlu0 %88, %v51
    %v90 = vpop.permute.xlu0 %89
    %93 = vset.pattern.permute.xlu0 0
    %94 = vperm.xlu0 %93, %v52
    %v95 = vpop.permute.xlu0 %94
    %98 = vset.pattern.permute.xlu0 0
    %99 = vperm.xlu0 %98, %v53
    %v100 = vpop.permute.xlu0 %99
    %103 = vset.pattern.permute.xlu0 0
    %104 = vperm.xlu0 %103, %v54
    %v105 = vpop.permute.xlu0 %104
    %108 = vset.pattern.permute.xlu0 0
    %109 = vperm.xlu0 %108, %v55
    %v110 = vpop.permute.xlu0 %109
    %113 = vset.pattern.permute.xlu0 0
    %114 = vperm.xlu0 %113, %v56
    %v115 = vpop.permute.xlu0 %114
    %v129 = vunpack.c.l.b16 %v33
    %v130 = vunpack.c.l.b16 %v34
    %v131 = vunpack.c.l.b16 %v35
    %v132 = vunpack.c.l.b16 %v36
    %v133 = vunpack.c.l.b16 %v37
    %v134 = vunpack.c.l.b16 %v38
    %v135 = vunpack.c.l.b16 %v39
    %v136 = vunpack.c.l.b16 %v40
    %v137 = vunpack.c.l.b16 %v41
    %v138 = vunpack.c.l.b16 %v42
    %v139 = vunpack.c.l.b16 %v43
    %v140 = vunpack.c.l.b16 %v44
    %v141 = vpack.c.b16 %v130, %v129
    %v142 = vpack.c.b16 %v132, %v131
    %v143 = vpack.c.b16 %v134, %v133
    %v144 = vpack.c.b16 %v136, %v135
    %v145 = vpack.c.b16 %v138, %v137
    %v146 = vpack.c.b16 %v140, %v139
    %v151 = vunpack.c.l.b16 %v29
    %v152 = vunpack.c.h.b16 %v29
    %v153 = vunpack.c.l.b16 %v30
    %v154 = vunpack.c.h.b16 %v30
    %v155 = vunpack.c.l.b16 %v31
    %v156 = vunpack.c.h.b16 %v31
    %v157 = vunpack.c.l.b16 %v32
    %v158 = vunpack.c.h.b16 %v32
    %v159 = vpack.c.b16 %v155, %v151
    %v160 = vpack.c.b16 %v156, %v152
    %v161 = vpack.c.b16 %v157, %v153
    %v162 = vpack.c.b16 %v158, %v154
    %vm167 = vcmask 130048
    %v169 = vsel %vm167, %v141, 0
    %v172 = vsel %vm167, %v142, 0
    %v175 = vsel %vm167, %v143, 0
    %v178 = vsel %vm167, %v144, 0
    %v181 = vsel %vm167, %v145, 0
    %v184 = vsel %vm167, %v146, 0
    %186 = vmatprep.subr.bf16.mxu0 %v160
    %187 = vmatpush1.bf16.msra.mxu0 %v159
    %188 = vmatprep.subr.bf16.mxu0 0
    %189 = vmatpush1.bf16.msra.mxu0 0
    %190 = vmatprep.subr.bf16.mxu0 0
    %191 = vmatpush1.bf16.msra.mxu0 0
    %192 = vmatprep.subr.bf16.mxu0 0
    %193 = vmatpush1.bf16.msra.mxu0 0
    %194 = vmatprep.subr.bf16.mxu0 0
    %195 = vmatpush1.bf16.msra.mxu0 0
    %196 = vmatprep.subr.bf16.mxu0 0
    %197 = vmatpush1.bf16.msra.mxu0 0
    %198 = vmatprep.subr.bf16.mxu0 0
    %199 = vmatpush1.bf16.msra.mxu0 0
    %200 = vmatprep.subr.bf16.mxu0 0
    %201 = vmatpush1.bf16.msra.mxu0 0
    %202 = vmatprep.subr.bf16.mxu0 0
    %203 = vmatpush1.bf16.msra.mxu0 0
    %204 = vmatprep.subr.bf16.mxu0 0
    %205 = vmatpush1.bf16.msra.mxu0 0
    %206 = vmatprep.subr.bf16.mxu0 0
    %207 = vmatpush1.bf16.msra.mxu0 0
    %208 = vmatprep.subr.bf16.mxu0 0
    %209 = vmatpush1.bf16.msra.mxu0 0
    %210 = vmatprep.subr.bf16.mxu0 0
    %211 = vmatpush1.bf16.msra.mxu0 0
    %212 = vmatprep.subr.bf16.mxu0 0
    %213 = vmatpush1.bf16.msra.mxu0 0
    %214 = vmatprep.subr.bf16.mxu0 0
    %215 = vmatpush1.bf16.msra.mxu0 0
    %216 = vmatprep.subr.bf16.mxu0 0
    %217 = vmatpush1.bf16.msra.mxu0 0
    %218 = vmatprep.mubr.bf16.mxu0 0
    %219 = vmatmul.mubr.bf16.gmra.mrb[0].mxu0 %v169
    %v220 = vpop.f32.mrb[0].mxu0
    %v221 = vadd.f32 %v60, %v220
    %v222 = vpop.f32.mrb[0].mxu0
    %v223 = vadd.f32 %v60, %v222
    %v224 = vpop.f32.mrb[0].mxu0
    %v225 = vadd.f32 %v65, %v224
    %v226 = vpop.f32.mrb[0].mxu0
    %v227 = vadd.f32 %v65, %v226
    %228 = vmatprep.mubr.bf16.mxu0 0
    %229 = vmatmul.mubr.bf16.gmra.mrb[0].mxu0 %v172
    %v230 = vpop.f32.mrb[0].mxu0
    %v231 = vadd.f32 %v70, %v230
    %v232 = vpop.f32.mrb[0].mxu0
    %v233 = vadd.f32 %v70, %v232
    %v234 = vpop.f32.mrb[0].mxu0
    %v235 = vadd.f32 %v75, %v234
    %v236 = vpop.f32.mrb[0].mxu0
    %v237 = vadd.f32 %v75, %v236
    %238 = vmatprep.mubr.bf16.mxu0 0
    %239 = vmatmul.mubr.bf16.gmra.mrb[0].mxu0 %v175
    %v240 = vpop.f32.mrb[0].mxu0
    %v241 = vadd.f32 %v80, %v240
    %v242 = vpop.f32.mrb[0].mxu0
    %v243 = vadd.f32 %v80, %v242
    %v244 = vpop.f32.mrb[0].mxu0
    %v245 = vadd.f32 %v85, %v244
    %v246 = vpop.f32.mrb[0].mxu0
    %v247 = vadd.f32 %v85, %v246
    %248 = vmatprep.mubr.bf16.mxu0 0
    %249 = vmatmul.mubr.bf16.gmra.mrb[0].mxu0 %v178
    %v250 = vpop.f32.mrb[0].mxu0
    %v251 = vadd.f32 %v90, %v250
    %v252 = vpop.f32.mrb[0].mxu0
    %v253 = vadd.f32 %v90, %v252
    %v254 = vpop.f32.mrb[0].mxu0
    %v255 = vadd.f32 %v95, %v254
    %v256 = vpop.f32.mrb[0].mxu0
    %v257 = vadd.f32 %v95, %v256
    %258 = vmatprep.mubr.bf16.mxu0 0
    %259 = vmatmul.mubr.bf16.gmra.mrb[0].mxu0 %v181
    %v260 = vpop.f32.mrb[0].mxu0
    %v261 = vadd.f32 %v100, %v260
    %v262 = vpop.f32.mrb[0].mxu0
    %v263 = vadd.f32 %v100, %v262
    %v264 = vpop.f32.mrb[0].mxu0
    %v265 = vadd.f32 %v105, %v264
    %v266 = vpop.f32.mrb[0].mxu0
    %v267 = vadd.f32 %v105, %v266
    %268 = vmatprep.mubr.bf16.mxu0 0
    %269 = vmatmul.mubr.bf16.gmra.mrb[0].mxu0 %v184
    %v270 = vpop.f32.mrb[0].mxu0
    %v271 = vadd.f32 %v110, %v270
    %v272 = vpop.f32.mrb[0].mxu0
    %v273 = vadd.f32 %v110, %v272
    %v274 = vpop.f32.mrb[0].mxu0
    %v275 = vadd.f32 %v115, %v274
    %v276 = vpop.f32.mrb[0].mxu0
    %v277 = vadd.f32 %v115, %v276
    %278 = vdwg.mxu0
    %279 = vmatprep.subr.bf16.mxu0 %v162
    %280 = vmatpush1.bf16.msra.mxu0 %v161
    %281 = vmatprep.subr.bf16.mxu0 0
    %282 = vmatpush1.bf16.msra.mxu0 0
    %283 = vmatprep.subr.bf16.mxu0 0
    %284 = vmatpush1.bf16.msra.mxu0 0
    %285 = vmatprep.subr.bf16.mxu0 0
    %286 = vmatpush1.bf16.msra.mxu0 0
    %287 = vmatprep.subr.bf16.mxu0 0
    %288 = vmatpush1.bf16.msra.mxu0 0
    %289 = vmatprep.subr.bf16.mxu0 0
    %290 = vmatpush1.bf16.msra.mxu0 0
    %291 = vmatprep.subr.bf16.mxu0 0
    %292 = vmatpush1.bf16.msra.mxu0 0
    %293 = vmatprep.subr.bf16.mxu0 0
    %294 = vmatpush1.bf16.msra.mxu0 0
    %295 = vmatprep.subr.bf16.mxu0 0
    %296 = vmatpush1.bf16.msra.mxu0 0
    %297 = vmatprep.subr.bf16.mxu0 0
    %298 = vmatpush1.bf16.msra.mxu0 0
    %299 = vmatprep.subr.bf16.mxu0 0
    %300 = vmatpush1.bf16.msra.mxu0 0
    %301 = vmatprep.subr.bf16.mxu0 0
    %302 = vmatpush1.bf16.msra.mxu0 0
    %303 = vmatprep.subr.bf16.mxu0 0
    %304 = vmatpush1.bf16.msra.mxu0 0
    %305 = vmatprep.subr.bf16.mxu0 0
    %306 = vmatpush1.bf16.msra.mxu0 0
    %307 = vmatprep.subr.bf16.mxu0 0
    %308 = vmatpush1.bf16.msra.mxu0 0
    %309 = vmatprep.subr.bf16.mxu0 0
    %310 = vmatpush1.bf16.msra.mxu0 0
    %311 = vmatprep.mubr.bf16.mxu0 0
    %312 = vmatmul.mubr.bf16.gmra.mrb[0].mxu0 %v169
    %v313 = vpop.f32.mrb[0].mxu0
    %v314 = vadd.f32 %v60, %v313
    %v315 = vpop.f32.mrb[0].mxu0
    %v316 = vadd.f32 %v60, %v315
    %v317 = vpop.f32.mrb[0].mxu0
    %v318 = vadd.f32 %v65, %v317
    %v319 = vpop.f32.mrb[0].mxu0
    %v320 = vadd.f32 %v65, %v319
    %321 = vmatprep.mubr.bf16.mxu0 0
    %322 = vmatmul.mubr.bf16.gmra.mrb[0].mxu0 %v172
    %v323 = vpop.f32.mrb[0].mxu0
    %v324 = vadd.f32 %v70, %v323
    %v325 = vpop.f32.mrb[0].mxu0
    %v326 = vadd.f32 %v70, %v325
    %v327 = vpop.f32.mrb[0].mxu0
    %v328 = vadd.f32 %v75, %v327
    %v329 = vpop.f32.mrb[0].mxu0
    %v330 = vadd.f32 %v75, %v329
    %331 = vmatprep.mubr.bf16.mxu0 0
    %332 = vmatmul.mubr.bf16.gmra.mrb[0].mxu0 %v175
    %v333 = vpop.f32.mrb[0].mxu0
    %v334 = vadd.f32 %v80, %v333
    %v335 = vpop.f32.mrb[0].mxu0
    %v336 = vadd.f32 %v80, %v335
    %v337 = vpop.f32.mrb[0].mxu0
    %v338 = vadd.f32 %v85, %v337
    %v339 = vpop.f32.mrb[0].mxu0
    %v340 = vadd.f32 %v85, %v339
    %341 = vmatprep.mubr.bf16.mxu0 0
    %342 = vmatmul.mubr.bf16.gmra.mrb[0].mxu0 %v178
    %v343 = vpop.f32.mrb[0].mxu0
    %v344 = vadd.f32 %v90, %v343
    %v345 = vpop.f32.mrb[0].mxu0
    %v346 = vadd.f32 %v90, %v345
    %v347 = vpop.f32.mrb[0].mxu0
    %v348 = vadd.f32 %v95, %v347
    %v349 = vpop.f32.mrb[0].mxu0
    %v350 = vadd.f32 %v95, %v349
    %351 = vmatprep.mubr.bf16.mxu0 0
    %352 = vmatmul.mubr.bf16.gmra.mrb[0].mxu0 %v181
    %v353 = vpop.f32.mrb[0].mxu0
    %v354 = vadd.f32 %v100, %v353
    %v355 = vpop.f32.mrb[0].mxu0
    %v356 = vadd.f32 %v100, %v355
    %v357 = vpop.f32.mrb[0].mxu0
    %v358 = vadd.f32 %v105, %v357
    %v359 = vpop.f32.mrb[0].mxu0
    %v360 = vadd.f32 %v105, %v359
    %361 = vmatprep.mubr.bf16.mxu0 0
    %362 = vmatmul.mubr.bf16.gmra.mrb[0].mxu0 %v184
    %v363 = vpop.f32.mrb[0].mxu0
    %v364 = vadd.f32 %v110, %v363
    %v365 = vpop.f32.mrb[0].mxu0
    %v366 = vadd.f32 %v110, %v365
    %v367 = vpop.f32.mrb[0].mxu0
    %v368 = vadd.f32 %v115, %v367
    %v369 = vpop.f32.mrb[0].mxu0
    %v370 = vadd.f32 %v115, %v369
    %371 = vdwg.mxu0
    %v372 = vmax.f32 %v221, 0.0
    %v373 = vmax.f32 %v223, 0.0
    %v374 = vmax.f32 %v314, 0.0
    %v375 = vmax.f32 %v316, 0.0
    %v376 = vmax.f32 %v225, 0.0
    %v377 = vmax.f32 %v227, 0.0
    %v378 = vmax.f32 %v318, 0.0
    %v379 = vmax.f32 %v320, 0.0
    %v380 = vmax.f32 %v231, 0.0
    %v381 = vmax.f32 %v233, 0.0
    %v382 = vmax.f32 %v324, 0.0
    %v383 = vmax.f32 %v326, 0.0
    %v384 = vmax.f32 %v235, 0.0
    %v385 = vmax.f32 %v237, 0.0
    %v386 = vmax.f32 %v328, 0.0
    %v387 = vmax.f32 %v330, 0.0
    %v388 = vmax.f32 %v241, 0.0
    %v389 = vmax.f32 %v243, 0.0
    %v390 = vmax.f32 %v334, 0.0
    %v391 = vmax.f32 %v336, 0.0
    %v392 = vmax.f32 %v245, 0.0
    %v393 = vmax.f32 %v247, 0.0
    %v394 = vmax.f32 %v338, 0.0
    %v395 = vmax.f32 %v340, 0.0
    %v396 = vmax.f32 %v251, 0.0
    %v397 = vmax.f32 %v253, 0.0
    %v398 = vmax.f32 %v344, 0.0
    %v399 = vmax.f32 %v346, 0.0
    %v400 = vmax.f32 %v255, 0.0
    %v401 = vmax.f32 %v257, 0.0
    %v402 = vmax.f32 %v348, 0.0
    %v403 = vmax.f32 %v350, 0.0
    %v404 = vmax.f32 %v261, 0.0
    %v405 = vmax.f32 %v263, 0.0
    %v406 = vmax.f32 %v354, 0.0
    %v407 = vmax.f32 %v356, 0.0
    %v408 = vmax.f32 %v265, 0.0
    %v409 = vmax.f32 %v267, 0.0
    %v410 = vmax.f32 %v358, 0.0
    %v411 = vmax.f32 %v360, 0.0
    %v412 = vmax.f32 %v271, 0.0
    %v413 = vmax.f32 %v273, 0.0
    %v414 = vmax.f32 %v364, 0.0
    %v415 = vmax.f32 %v366, 0.0
    %v416 = vmax.f32 %v275, 0.0
    %v417 = vmax.f32 %v277, 0.0
    %v418 = vmax.f32 %v368, 0.0
    %v419 = vmax.f32 %v370, 0.0
    %v420 = vld [vmem:[%s3] sm:$0xf]
    %v421 = vld [vmem:[%s3 + $0x4] sm:$0xf]
    %v422 = vld [vmem:[%s3 + $0x8] sm:$0xf]
    %v423 = vld [vmem:[%s3 + $0xc] sm:$0xf]
    %v424 = vld [vmem:[%s3 + $0x10] sm:$0xf]
    %v425 = vld [vmem:[%s3 + $0x14] sm:$0xf]
    %v426 = vld [vmem:[%s3 + $0x18] sm:$0xf]
    %v427 = vld [vmem:[%s3 + $0x1c] sm:$0xf]
    %v428 = vld [vmem:[%s3 + $0x20] sm:$0xf]
    %v429 = vld [vmem:[%s3 + $0x24] sm:$0xf]
    %v430 = vld [vmem:[%s3 + $0x28] sm:$0xf]
    %v431 = vld [vmem:[%s3 + $0x2c] sm:$0xf]
    %v432 = vld [vmem:[%s3 + $0x30] sm:$0xf]
    %v433 = vld [vmem:[%s3 + $0x34] sm:$0xf]
    %v434 = vld [vmem:[%s3 + $0x38] sm:$0xf]
    %v435 = vld [vmem:[%s3 + $0x3c] sm:$0xf]
    %v436 = vpack.c.bf16 %v376, %v372
    %v437 = vpack.c.bf16 %v377, %v373
    %v438 = vpack.c.bf16 %v378, %v374
    %v439 = vpack.c.bf16 %v379, %v375
    %v440 = vpack.c.bf16 %v384, %v380
    %v441 = vpack.c.bf16 %v385, %v381
    %v442 = vpack.c.bf16 %v386, %v382
    %v443 = vpack.c.bf16 %v387, %v383
    %v444 = vpack.c.bf16 %v392, %v388
    %v445 = vpack.c.bf16 %v393, %v389
    %v446 = vpack.c.bf16 %v394, %v390
    %v447 = vpack.c.bf16 %v395, %v391
    %v448 = vpack.c.bf16 %v400, %v396
    %v449 = vpack.c.bf16 %v401, %v397
    %v450 = vpack.c.bf16 %v402, %v398
    %v451 = vpack.c.bf16 %v403, %v399
    %v452 = vpack.c.bf16 %v408, %v404
    %v453 = vpack.c.bf16 %v409, %v405
    %v454 = vpack.c.bf16 %v410, %v406
    %v455 = vpack.c.bf16 %v411, %v407
    %v456 = vpack.c.bf16 %v416, %v412
    %v457 = vpack.c.bf16 %v417, %v413
    %v458 = vpack.c.bf16 %v418, %v414
    %v459 = vpack.c.bf16 %v419, %v415
    %v460 = vld [vmem:[%s4] sm:$0xff]
    %v461 = vld [vmem:[%s4 + $0x8] sm:$0xff]
    %v462 = vld [vmem:[%s4 + $0x10] sm:$0xff]
    %v463 = vld [vmem:[%s4 + $0x18] sm:$0xff]
    %v464 = vld [vmem:[%s4 + $0x20] sm:$0xff]
    %v465 = vld [vmem:[%s4 + $0x28] sm:$0xff]
    %v466 = vld [vmem:[%s4 + $0x30] sm:$0xff]
    %v467 = vld [vmem:[%s4 + $0x38] sm:$0xff]
    %v468 = vld [vmem:[%s4 + $0x40] sm:$0xff]
    %v469 = vld [vmem:[%s4 + $0x48] sm:$0xff]
    %v470 = vld [vmem:[%s4 + $0x50] sm:$0xff]
    %v471 = vld [vmem:[%s4 + $0x58] sm:$0xff]
    %v472 = vld [vmem:[%s4 + $0x60] sm:$0xff]
    %v473 = vld [vmem:[%s4 + $0x68] sm:$0xff]
    %v474 = vld [vmem:[%s4 + $0x70] sm:$0xff]
    %v475 = vld [vmem:[%s4 + $0x78] sm:$0xff]
    %477 = vset.pattern.permute.xlu0 0
    %478 = vperm.xlu0 %477, %v460
    %v479 = vpop.permute.xlu0 %478
    %482 = vset.pattern.permute.xlu0 0
    %483 = vperm.xlu0 %482, %v461
    %v484 = vpop.permute.xlu0 %483
    %487 = vset.pattern.permute.xlu0 0
    %488 = vperm.xlu0 %487, %v462
    %v489 = vpop.permute.xlu0 %488
    %492 = vset.pattern.permute.xlu0 0
    %493 = vperm.xlu0 %492, %v463
    %v494 = vpop.permute.xlu0 %493
    %497 = vset.pattern.permute.xlu0 0
    %498 = vperm.xlu0 %497, %v464
    %v499 = vpop.permute.xlu0 %498
    %502 = vset.pattern.permute.xlu0 0
    %503 = vperm.xlu0 %502, %v465
    %v504 = vpop.permute.xlu0 %503
    %507 = vset.pattern.permute.xlu0 0
    %508 = vperm.xlu0 %507, %v466
    %v509 = vpop.permute.xlu0 %508
    %512 = vset.pattern.permute.xlu0 0
    %513 = vperm.xlu0 %512, %v467
    %v514 = vpop.permute.xlu0 %513
    %517 = vset.pattern.permute.xlu0 0
    %518 = vperm.xlu0 %517, %v468
    %v519 = vpop.permute.xlu0 %518
    %522 = vset.pattern.permute.xlu0 0
    %523 = vperm.xlu0 %522, %v469
    %v524 = vpop.permute.xlu0 %523
    %527 = vset.pattern.permute.xlu0 0
    %528 = vperm.xlu0 %527, %v470
    %v529 = vpop.permute.xlu0 %528
    %532 = vset.pattern.permute.xlu0 0
    %533 = vperm.xlu0 %532, %v471
    %v534 = vpop.permute.xlu0 %533
    %537 = vset.pattern.permute.xlu0 0
    %538 = vperm.xlu0 %537, %v472
    %v539 = vpop.permute.xlu0 %538
    %542 = vset.pattern.permute.xlu0 0
    %543 = vperm.xlu0 %542, %v473
    %v544 = vpop.permute.xlu0 %543
    %547 = vset.pattern.permute.xlu0 0
    %548 = vperm.xlu0 %547, %v474
    %v549 = vpop.permute.xlu0 %548
    %552 = vset.pattern.permute.xlu0 0
    %553 = vperm.xlu0 %552, %v475
    %v554 = vpop.permute.xlu0 %553
    %v572 = vunpack.c.l.b16 %v420
    %v573 = vunpack.c.l.b16 %v421
    %v574 = vunpack.c.l.b16 %v422
    %v575 = vunpack.c.l.b16 %v423
    %v576 = vunpack.c.l.b16 %v424
    %v577 = vunpack.c.l.b16 %v425
    %v578 = vunpack.c.l.b16 %v426
    %v579 = vunpack.c.l.b16 %v427
    %v580 = vunpack.c.l.b16 %v428
    %v581 = vunpack.c.l.b16 %v429
    %v582 = vunpack.c.l.b16 %v430
    %v583 = vunpack.c.l.b16 %v431
    %v584 = vunpack.c.l.b16 %v432
    %v585 = vunpack.c.l.b16 %v433
    %v586 = vunpack.c.l.b16 %v434
    %v587 = vunpack.c.l.b16 %v435
    %v588 = vpack.c.b16 %v573, %v572
    %v589 = vpack.c.b16 %v575, %v574
    %v590 = vpack.c.b16 %v577, %v576
    %v591 = vpack.c.b16 %v579, %v578
    %v592 = vpack.c.b16 %v581, %v580
    %v593 = vpack.c.b16 %v583, %v582
    %v594 = vpack.c.b16 %v585, %v584
    %v595 = vpack.c.b16 %v587, %v586
    %vm596 = vcmask 785408
    %v598 = vsel %vm596, %v588, 0
    %v601 = vsel %vm596, %v589, 0
    %v604 = vsel %vm596, %v590, 0
    %v607 = vsel %vm596, %v591, 0
    %v610 = vsel %vm596, %v592, 0
    %v613 = vsel %vm596, %v593, 0
    %v616 = vsel %vm596, %v594, 0
    %v619 = vsel %vm596, %v595, 0
    %621 = vmatprep.subr.bf16.mxu0 %v437
    %622 = vmatpush1.bf16.msra.mxu0 %v436
    %623 = vmatprep.subr.bf16.mxu0 %v441
    %624 = vmatpush1.bf16.msra.mxu0 %v440
    %625 = vmatprep.subr.bf16.mxu0 %v445
    %626 = vmatpush1.bf16.msra.mxu0 %v444
    %627 = vmatprep.subr.bf16.mxu0 %v449
    %628 = vmatpush1.bf16.msra.mxu0 %v448
    %629 = vmatprep.subr.bf16.mxu0 %v453
    %630 = vmatpush1.bf16.msra.mxu0 %v452
    %631 = vmatprep.subr.bf16.mxu0 %v457
    %632 = vmatpush1.bf16.msra.mxu0 %v456
    %633 = vmatprep.subr.bf16.mxu0 0
    %634 = vmatpush1.bf16.msra.mxu0 0
    %635 = vmatprep.subr.bf16.mxu0 0
    %636 = vmatpush1.bf16.msra.mxu0 0
    %637 = vmatprep.subr.bf16.mxu0 0
    %638 = vmatpush1.bf16.msra.mxu0 0
    %639 = vmatprep.subr.bf16.mxu0 0
    %640 = vmatpush1.bf16.msra.mxu0 0
    %641 = vmatprep.subr.bf16.mxu0 0
    %642 = vmatpush1.bf16.msra.mxu0 0
    %643 = vmatprep.subr.bf16.mxu0 0
    %644 = vmatpush1.bf16.msra.mxu0 0
    %645 = vmatprep.subr.bf16.mxu0 0
    %646 = vmatpush1.bf16.msra.mxu0 0
    %647 = vmatprep.subr.bf16.mxu0 0
    %648 = vmatpush1.bf16.msra.mxu0 0
    %649 = vmatprep.subr.bf16.mxu0 0
    %650 = vmatpush1.bf16.msra.mxu0 0
    %651 = vmatprep.subr.bf16.mxu0 0
    %652 = vmatpush1.bf16.msra.mxu0 0
    %653 = vmatprep.mubr.bf16.mxu0 0
    %654 = vmatmul.mubr.bf16.gmra.mrb[0].mxu0 %v598
    %v655 = vpop.f32.mrb[0].mxu0
    %v656 = vadd.f32 %v479, %v655
    %v657 = vpop.f32.mrb[0].mxu0
    %v658 = vadd.f32 %v479, %v657
    %v659 = vpop.f32.mrb[0].mxu0
    %v660 = vadd.f32 %v484, %v659
    %v661 = vpop.f32.mrb[0].mxu0
    %v662 = vadd.f32 %v484, %v661
    %663 = vmatprep.mubr.bf16.mxu0 0
    %664 = vmatmul.mubr.bf16.gmra.mrb[0].mxu0 %v601
    %v665 = vpop.f32.mrb[0].mxu0
    %v666 = vadd.f32 %v489, %v665
    %v667 = vpop.f32.mrb[0].mxu0
    %v668 = vadd.f32 %v489, %v667
    %v669 = vpop.f32.mrb[0].mxu0
    %v670 = vadd.f32 %v494, %v669
    %v671 = vpop.f32.mrb[0].mxu0
    %v672 = vadd.f32 %v494, %v671
    %673 = vmatprep.mubr.bf16.mxu0 0
    %674 = vmatmul.mubr.bf16.gmra.mrb[0].mxu0 %v604
    %v675 = vpop.f32.mrb[0].mxu0
    %v676 = vadd.f32 %v499, %v675
    %v677 = vpop.f32.mrb[0].mxu0
    %v678 = vadd.f32 %v499, %v677
    %v679 = vpop.f32.mrb[0].mxu0
    %v680 = vadd.f32 %v504, %v679
    %v681 = vpop.f32.mrb[0].mxu0
    %v682 = vadd.f32 %v504, %v681
    %683 = vmatprep.mubr.bf16.mxu0 0
    %684 = vmatmul.mubr.bf16.gmra.mrb[0].mxu0 %v607
    %v685 = vpop.f32.mrb[0].mxu0
    %v686 = vadd.f32 %v509, %v685
    %v687 = vpop.f32.mrb[0].mxu0
    %v688 = vadd.f32 %v509, %v687
    %v689 = vpop.f32.mrb[0].mxu0
    %v690 = vadd.f32 %v514, %v689
    %v691 = vpop.f32.mrb[0].mxu0
    %v692 = vadd.f32 %v514, %v691
    %693 = vmatprep.mubr.bf16.mxu0 0
    %694 = vmatmul.mubr.bf16.gmra.mrb[0].mxu0 %v610
    %v695 = vpop.f32.mrb[0].mxu0
    %v696 = vadd.f32 %v519, %v695
    %v697 = vpop.f32.mrb[0].mxu0
    %v698 = vadd.f32 %v519, %v697
    %v699 = vpop.f32.mrb[0].mxu0
    %v700 = vadd.f32 %v524, %v699
    %v701 = vpop.f32.mrb[0].mxu0
    %v702 = vadd.f32 %v524, %v701
    %703 = vmatprep.mubr.bf16.mxu0 0
    %704 = vmatmul.mubr.bf16.gmra.mrb[0].mxu0 %v613
    %v705 = vpop.f32.mrb[0].mxu0
    %v706 = vadd.f32 %v529, %v705
    %v707 = vpop.f32.mrb[0].mxu0
    %v708 = vadd.f32 %v529, %v707
    %v709 = vpop.f32.mrb[0].mxu0
    %v710 = vadd.f32 %v534, %v709
    %v711 = vpop.f32.mrb[0].mxu0
    %v712 = vadd.f32 %v534, %v711
    %713 = vmatprep.mubr.bf16.mxu0 0
    %714 = vmatmul.mubr.bf16.gmra.mrb[0].mxu0 %v616
    %v715 = vpop.f32.mrb[0].mxu0
    %v716 = vadd.f32 %v539, %v715
    %v717 = vpop.f32.mrb[0].mxu0
    %v718 = vadd.f32 %v539, %v717
    %v719 = vpop.f32.mrb[0].mxu0
    %v720 = vadd.f32 %v544, %v719
    %v721 = vpop.f32.mrb[0].mxu0
    %v722 = vadd.f32 %v544, %v721
    %723 = vmatprep.mubr.bf16.mxu0 0
    %724 = vmatmul.mubr.bf16.gmra.mrb[0].mxu0 %v619
    %v725 = vpop.f32.mrb[0].mxu0
    %v726 = vadd.f32 %v549, %v725
    %v727 = vpop.f32.mrb[0].mxu0
    %v728 = vadd.f32 %v549, %v727
    %v729 = vpop.f32.mrb[0].mxu0
    %v730 = vadd.f32 %v554, %v729
    %v731 = vpop.f32.mrb[0].mxu0
    %v732 = vadd.f32 %v554, %v731
    %733 = vdwg.mxu0
    %734 = vmatprep.subr.bf16.mxu0 %v439
    %735 = vmatpush1.bf16.msra.mxu0 %v438
    %736 = vmatprep.subr.bf16.mxu0 %v443
    %737 = vmatpush1.bf16.msra.mxu0 %v442
    %738 = vmatprep.subr.bf16.mxu0 %v447
    %739 = vmatpush1.bf16.msra.mxu0 %v446
    %740 = vmatprep.subr.bf16.mxu0 %v451
    %741 = vmatpush1.bf16.msra.mxu0 %v450
    %742 = vmatprep.subr.bf16.mxu0 %v455
    %743 = vmatpush1.bf16.msra.mxu0 %v454
    %744 = vmatprep.subr.bf16.mxu0 %v459
    %745 = vmatpush1.bf16.msra.mxu0 %v458
    %746 = vmatprep.subr.bf16.mxu0 0
    %747 = vmatpush1.bf16.msra.mxu0 0
    %748 = vmatprep.subr.bf16.mxu0 0
    %749 = vmatpush1.bf16.msra.mxu0 0
    %750 = vmatprep.subr.bf16.mxu0 0
    %751 = vmatpush1.bf16.msra.mxu0 0
    %752 = vmatprep.subr.bf16.mxu0 0
    %753 = vmatpush1.bf16.msra.mxu0 0
    %754 = vmatprep.subr.bf16.mxu0 0
    %755 = vmatpush1.bf16.msra.mxu0 0
    %756 = vmatprep.subr.bf16.mxu0 0
    %757 = vmatpush1.bf16.msra.mxu0 0
    %758 = vmatprep.subr.bf16.mxu0 0
    %759 = vmatpush1.bf16.msra.mxu0 0
    %760 = vmatprep.subr.bf16.mxu0 0
    %761 = vmatpush1.bf16.msra.mxu0 0
    %762 = vmatprep.subr.bf16.mxu0 0
    %763 = vmatpush1.bf16.msra.mxu0 0
    %764 = vmatprep.subr.bf16.mxu0 0
    %765 = vmatpush1.bf16.msra.mxu0 0
    %766 = vmatprep.mubr.bf16.mxu0 0
    %767 = vmatmul.mubr.bf16.gmra.mrb[0].mxu0 %v598
    %v768 = vpop.f32.mrb[0].mxu0
    %v769 = vadd.f32 %v479, %v768
    %v770 = vpop.f32.mrb[0].mxu0
    %v771 = vadd.f32 %v479, %v770
    %v772 = vpop.f32.mrb[0].mxu0
    %v773 = vadd.f32 %v484, %v772
    %v774 = vpop.f32.mrb[0].mxu0
    %v775 = vadd.f32 %v484, %v774
    %776 = vmatprep.mubr.bf16.mxu0 0
    %777 = vmatmul.mubr.bf16.gmra.mrb[0].mxu0 %v601
    %v778 = vpop.f32.mrb[0].mxu0
    %v779 = vadd.f32 %v489, %v778
    %v780 = vpop.f32.mrb[0].mxu0
    %v781 = vadd.f32 %v489, %v780
    %v782 = vpop.f32.mrb[0].mxu0
    %v783 = vadd.f32 %v494, %v782
    %v784 = vpop.f32.mrb[0].mxu0
    %v785 = vadd.f32 %v494, %v784
    %786 = vmatprep.mubr.bf16.mxu0 0
    %787 = vmatmul.mubr.bf16.gmra.mrb[0].mxu0 %v604
    %v788 = vpop.f32.mrb[0].mxu0
    %v789 = vadd.f32 %v499, %v788
    %v790 = vpop.f32.mrb[0].mxu0
    %v791 = vadd.f32 %v499, %v790
    %v792 = vpop.f32.mrb[0].mxu0
    %v793 = vadd.f32 %v504, %v792
    %v794 = vpop.f32.mrb[0].mxu0
    %v795 = vadd.f32 %v504, %v794
    %796 = vmatprep.mubr.bf16.mxu0 0
    %797 = vmatmul.mubr.bf16.gmra.mrb[0].mxu0 %v607
    %v798 = vpop.f32.mrb[0].mxu0
    %v799 = vadd.f32 %v509, %v798
    %v800 = vpop.f32.mrb[0].mxu0
    %v801 = vadd.f32 %v509, %v800
    %v802 = vpop.f32.mrb[0].mxu0
    %v803 = vadd.f32 %v514, %v802
    %v804 = vpop.f32.mrb[0].mxu0
    %v805 = vadd.f32 %v514, %v804
    %806 = vmatprep.mubr.bf16.mxu0 0
    %807 = vmatmul.mubr.bf16.gmra.mrb[0].mxu0 %v610
    %v808 = vpop.f32.mrb[0].mxu0
    %v809 = vadd.f32 %v519, %v808
    %v810 = vpop.f32.mrb[0].mxu0
    %v811 = vadd.f32 %v519, %v810
    %v812 = vpop.f32.mrb[0].mxu0
    %v813 = vadd.f32 %v524, %v812
    %v814 = vpop.f32.mrb[0].mxu0
    %v815 = vadd.f32 %v524, %v814
    %816 = vmatprep.mubr.bf16.mxu0 0
    %817 = vmatmul.mubr.bf16.gmra.mrb[0].mxu0 %v613
    %v818 = vpop.f32.mrb[0].mxu0
    %v819 = vadd.f32 %v529, %v818
    %v820 = vpop.f32.mrb[0].mxu0
    %v821 = vadd.f32 %v529, %v820
    %v822 = vpop.f32.mrb[0].mxu0
    %v823 = vadd.f32 %v534, %v822
    %v824 = vpop.f32.mrb[0].mxu0
    %v825 = vadd.f32 %v534, %v824
    %826 = vmatprep.mubr.bf16.mxu0 0
    %827 = vmatmul.mubr.bf16.gmra.mrb[0].mxu0 %v616
    %v828 = vpop.f32.mrb[0].mxu0
    %v829 = vadd.f32 %v539, %v828
    %v830 = vpop.f32.mrb[0].mxu0
    %v831 = vadd.f32 %v539, %v830
    %v832 = vpop.f32.mrb[0].mxu0
    %v833 = vadd.f32 %v544, %v832
    %v834 = vpop.f32.mrb[0].mxu0
    %v835 = vadd.f32 %v544, %v834
    %836 = vmatprep.mubr.bf16.mxu0 0
    %837 = vmatmul.mubr.bf16.gmra.mrb[0].mxu0 %v619
    %v838 = vpop.f32.mrb[0].mxu0
    %v839 = vadd.f32 %v549, %v838
    %v840 = vpop.f32.mrb[0].mxu0
    %v841 = vadd.f32 %v549, %v840
    %v842 = vpop.f32.mrb[0].mxu0
    %v843 = vadd.f32 %v554, %v842
    %v844 = vpop.f32.mrb[0].mxu0
    %v845 = vadd.f32 %v554, %v844
    %846 = vdwg.mxu0
    %v847 = vmax.f32 %v656, 0.0
    %v848 = vmax.f32 %v658, 0.0
    %v849 = vmax.f32 %v769, 0.0
    %v850 = vmax.f32 %v771, 0.0
    %v851 = vmax.f32 %v660, 0.0
    %v852 = vmax.f32 %v662, 0.0
    %v853 = vmax.f32 %v773, 0.0
    %v854 = vmax.f32 %v775, 0.0
    %v855 = vmax.f32 %v666, 0.0
    %v856 = vmax.f32 %v668, 0.0
    %v857 = vmax.f32 %v779, 0.0
    %v858 = vmax.f32 %v781, 0.0
    %v859 = vmax.f32 %v670, 0.0
    %v860 = vmax.f32 %v672, 0.0
    %v861 = vmax.f32 %v783, 0.0
    %v862 = vmax.f32 %v785, 0.0
    %v863 = vmax.f32 %v676, 0.0
    %v864 = vmax.f32 %v678, 0.0
    %v865 = vmax.f32 %v789, 0.0
    %v866 = vmax.f32 %v791, 0.0
    %v867 = vmax.f32 %v680, 0.0
    %v868 = vmax.f32 %v682, 0.0
    %v869 = vmax.f32 %v793, 0.0
    %v870 = vmax.f32 %v795, 0.0
    %v871 = vmax.f32 %v686, 0.0
    %v872 = vmax.f32 %v688, 0.0
    %v873 = vmax.f32 %v799, 0.0
    %v874 = vmax.f32 %v801, 0.0
    %v875 = vmax.f32 %v690, 0.0
    %v876 = vmax.f32 %v692, 0.0
    %v877 = vmax.f32 %v803, 0.0
    %v878 = vmax.f32 %v805, 0.0
    %v879 = vmax.f32 %v696, 0.0
    %v880 = vmax.f32 %v698, 0.0
    %v881 = vmax.f32 %v809, 0.0
    %v882 = vmax.f32 %v811, 0.0
    %v883 = vmax.f32 %v700, 0.0
    %v884 = vmax.f32 %v702, 0.0
    %v885 = vmax.f32 %v813, 0.0
    %v886 = vmax.f32 %v815, 0.0
    %v887 = vmax.f32 %v706, 0.0
    %v888 = vmax.f32 %v708, 0.0
    %v889 = vmax.f32 %v819, 0.0
    %v890 = vmax.f32 %v821, 0.0
    %v891 = vmax.f32 %v710, 0.0
    %v892 = vmax.f32 %v712, 0.0
    %v893 = vmax.f32 %v823, 0.0
    %v894 = vmax.f32 %v825, 0.0
    %v895 = vmax.f32 %v716, 0.0
    %v896 = vmax.f32 %v718, 0.0
    %v897 = vmax.f32 %v829, 0.0
    %v898 = vmax.f32 %v831, 0.0
    %v899 = vmax.f32 %v720, 0.0
    %v900 = vmax.f32 %v722, 0.0
    %v901 = vmax.f32 %v833, 0.0
    %v902 = vmax.f32 %v835, 0.0
    %v903 = vmax.f32 %v726, 0.0
    %v904 = vmax.f32 %v728, 0.0
    %v905 = vmax.f32 %v839, 0.0
    %v906 = vmax.f32 %v841, 0.0
    %v907 = vmax.f32 %v730, 0.0
    %v908 = vmax.f32 %v732, 0.0
    %v909 = vmax.f32 %v843, 0.0
    %v910 = vmax.f32 %v845, 0.0
    %v911 = vld [vmem:[%s5] sm:$0xff]
    %v912 = vld [vmem:[%s5 + $0x8] sm:$0xff]
    %v913 = vld [vmem:[%s5 + $0x10] sm:$0xff]
    %v914 = vld [vmem:[%s5 + $0x18] sm:$0xff]
    %v915 = vld [vmem:[%s5 + $0x20] sm:$0xff]
    %v916 = vld [vmem:[%s5 + $0x28] sm:$0xff]
    %v917 = vld [vmem:[%s5 + $0x30] sm:$0xff]
    %v918 = vld [vmem:[%s5 + $0x38] sm:$0xff]
    %v919 = vld [vmem:[%s5 + $0x40] sm:$0xff]
    %v920 = vld [vmem:[%s5 + $0x48] sm:$0xff]
    %v921 = vld [vmem:[%s5 + $0x50] sm:$0xff]
    %v922 = vld [vmem:[%s5 + $0x58] sm:$0xff]
    %v923 = vld [vmem:[%s5 + $0x60] sm:$0xff]
    %v924 = vld [vmem:[%s5 + $0x68] sm:$0xff]
    %v925 = vld [vmem:[%s5 + $0x70] sm:$0xff]
    %v926 = vld [vmem:[%s5 + $0x78] sm:$0xff]
    %928 = vset.pattern.permute.xlu0 0
    %929 = vperm.xlu0 %928, %v911
    %v930 = vpop.permute.xlu0 %929
    %933 = vset.pattern.permute.xlu0 0
    %934 = vperm.xlu0 %933, %v912
    %v935 = vpop.permute.xlu0 %934
    %938 = vset.pattern.permute.xlu0 0
    %939 = vperm.xlu0 %938, %v913
    %v940 = vpop.permute.xlu0 %939
    %943 = vset.pattern.permute.xlu0 0
    %944 = vperm.xlu0 %943, %v914
    %v945 = vpop.permute.xlu0 %944
    %948 = vset.pattern.permute.xlu0 0
    %949 = vperm.xlu0 %948, %v915
    %v950 = vpop.permute.xlu0 %949
    %953 = vset.pattern.permute.xlu0 0
    %954 = vperm.xlu0 %953, %v916
    %v955 = vpop.permute.xlu0 %954
    %958 = vset.pattern.permute.xlu0 0
    %959 = vperm.xlu0 %958, %v917
    %v960 = vpop.permute.xlu0 %959
    %963 = vset.pattern.permute.xlu0 0
    %964 = vperm.xlu0 %963, %v918
    %v965 = vpop.permute.xlu0 %964
    %968 = vset.pattern.permute.xlu0 0
    %969 = vperm.xlu0 %968, %v919
    %v970 = vpop.permute.xlu0 %969
    %973 = vset.pattern.permute.xlu0 0
    %974 = vperm.xlu0 %973, %v920
    %v975 = vpop.permute.xlu0 %974
    %978 = vset.pattern.permute.xlu0 0
    %979 = vperm.xlu0 %978, %v921
    %v980 = vpop.permute.xlu0 %979
    %983 = vset.pattern.permute.xlu0 0
    %984 = vperm.xlu0 %983, %v922
    %v985 = vpop.permute.xlu0 %984
    %988 = vset.pattern.permute.xlu0 0
    %989 = vperm.xlu0 %988, %v923
    %v990 = vpop.permute.xlu0 %989
    %993 = vset.pattern.permute.xlu0 0
    %994 = vperm.xlu0 %993, %v924
    %v995 = vpop.permute.xlu0 %994
    %998 = vset.pattern.permute.xlu0 0
    %999 = vperm.xlu0 %998, %v925
    %v1000 = vpop.permute.xlu0 %999
    %1003 = vset.pattern.permute.xlu0 0
    %1004 = vperm.xlu0 %1003, %v926
    %v1005 = vpop.permute.xlu0 %1004
    %v1007 = vmul.f32 %v847, %v930
    %v1008 = vmul.f32 %v848, %v930
    %v1009 = vmul.f32 %v849, %v930
    %v1010 = vmul.f32 %v850, %v930
    %v1011 = vmul.f32 %v851, %v935
    %v1012 = vmul.f32 %v852, %v935
    %v1013 = vmul.f32 %v853, %v935
    %v1014 = vmul.f32 %v854, %v935
    %v1015 = vmul.f32 %v855, %v940
    %v1016 = vmul.f32 %v856, %v940
    %v1017 = vmul.f32 %v857, %v940
    %v1018 = vmul.f32 %v858, %v940
    %v1019 = vmul.f32 %v859, %v945
    %v1020 = vmul.f32 %v860, %v945
    %v1021 = vmul.f32 %v861, %v945
    %v1022 = vmul.f32 %v862, %v945
    %v1023 = vmul.f32 %v863, %v950
    %v1024 = vmul.f32 %v864, %v950
    %v1025 = vmul.f32 %v865, %v950
    %v1026 = vmul.f32 %v866, %v950
    %v1027 = vmul.f32 %v867, %v955
    %v1028 = vmul.f32 %v868, %v955
    %v1029 = vmul.f32 %v869, %v955
    %v1030 = vmul.f32 %v870, %v955
    %v1031 = vmul.f32 %v871, %v960
    %v1032 = vmul.f32 %v872, %v960
    %v1033 = vmul.f32 %v873, %v960
    %v1034 = vmul.f32 %v874, %v960
    %v1035 = vmul.f32 %v875, %v965
    %v1036 = vmul.f32 %v876, %v965
    %v1037 = vmul.f32 %v877, %v965
    %v1038 = vmul.f32 %v878, %v965
    %v1039 = vmul.f32 %v879, %v970
    %v1040 = vmul.f32 %v880, %v970
    %v1041 = vmul.f32 %v881, %v970
    %v1042 = vmul.f32 %v882, %v970
    %v1043 = vmul.f32 %v883, %v975
    %v1044 = vmul.f32 %v884, %v975
    %v1045 = vmul.f32 %v885, %v975
    %v1046 = vmul.f32 %v886, %v975
    %v1047 = vmul.f32 %v887, %v980
    %v1048 = vmul.f32 %v888, %v980
    %v1049 = vmul.f32 %v889, %v980
    %v1050 = vmul.f32 %v890, %v980
    %v1051 = vmul.f32 %v891, %v985
    %v1052 = vmul.f32 %v892, %v985
    %v1053 = vmul.f32 %v893, %v985
    %v1054 = vmul.f32 %v894, %v985
    %v1055 = vmul.f32 %v895, %v990
    %v1056 = vmul.f32 %v896, %v990
    %v1057 = vmul.f32 %v897, %v990
    %v1058 = vmul.f32 %v898, %v990
    %v1059 = vmul.f32 %v899, %v995
    %v1060 = vmul.f32 %v900, %v995
    %v1061 = vmul.f32 %v901, %v995
    %v1062 = vmul.f32 %v902, %v995
    %v1063 = vmul.f32 %v903, %v1000
    %v1064 = vmul.f32 %v904, %v1000
    %v1065 = vmul.f32 %v905, %v1000
    %v1066 = vmul.f32 %v906, %v1000
    %v1067 = vmul.f32 %v907, %v1005
    %v1068 = vmul.f32 %v908, %v1005
    %v1069 = vmul.f32 %v909, %v1005
    %v1070 = vmul.f32 %v910, %v1005
    %v1071 = vadd.f32 %v1007, %v1011
    %v1072 = vadd.f32 %v1071, %v1015
    %v1073 = vadd.f32 %v1072, %v1019
    %v1074 = vadd.f32 %v1073, %v1023
    %v1075 = vadd.f32 %v1074, %v1027
    %v1076 = vadd.f32 %v1075, %v1031
    %v1077 = vadd.f32 %v1076, %v1035
    %v1078 = vadd.f32 %v1077, %v1039
    %v1079 = vadd.f32 %v1078, %v1043
    %v1080 = vadd.f32 %v1079, %v1047
    %v1081 = vadd.f32 %v1080, %v1051
    %v1082 = vadd.f32 %v1081, %v1055
    %v1083 = vadd.f32 %v1082, %v1059
    %v1084 = vadd.f32 %v1083, %v1063
    %v1085 = vadd.f32 %v1084, %v1067
    %v1086 = vrot.slane %v1085, 4
    %v1087 = vadd.f32 %v1085, %v1086
    %v1088 = vrot.slane %v1087, 2
    %v1089 = vadd.f32 %v1087, %v1088
    %v1090 = vrot.slane %v1089, 1
    %v1091 = vadd.f32 %v1089, %v1090
    %v1092 = vadd.f32 %v1008, %v1012
    %v1093 = vadd.f32 %v1092, %v1016
    %v1094 = vadd.f32 %v1093, %v1020
    %v1095 = vadd.f32 %v1094, %v1024
    %v1096 = vadd.f32 %v1095, %v1028
    %v1097 = vadd.f32 %v1096, %v1032
    %v1098 = vadd.f32 %v1097, %v1036
    %v1099 = vadd.f32 %v1098, %v1040
    %v1100 = vadd.f32 %v1099, %v1044
    %v1101 = vadd.f32 %v1100, %v1048
    %v1102 = vadd.f32 %v1101, %v1052
    %v1103 = vadd.f32 %v1102, %v1056
    %v1104 = vadd.f32 %v1103, %v1060
    %v1105 = vadd.f32 %v1104, %v1064
    %v1106 = vadd.f32 %v1105, %v1068
    %v1107 = vrot.slane %v1106, 4
    %v1108 = vadd.f32 %v1106, %v1107
    %v1109 = vrot.slane %v1108, 2
    %v1110 = vadd.f32 %v1108, %v1109
    %v1111 = vrot.slane %v1110, 1
    %v1112 = vadd.f32 %v1110, %v1111
    %v1113 = vadd.f32 %v1009, %v1013
    %v1114 = vadd.f32 %v1113, %v1017
    %v1115 = vadd.f32 %v1114, %v1021
    %v1116 = vadd.f32 %v1115, %v1025
    %v1117 = vadd.f32 %v1116, %v1029
    %v1118 = vadd.f32 %v1117, %v1033
    %v1119 = vadd.f32 %v1118, %v1037
    %v1120 = vadd.f32 %v1119, %v1041
    %v1121 = vadd.f32 %v1120, %v1045
    %v1122 = vadd.f32 %v1121, %v1049
    %v1123 = vadd.f32 %v1122, %v1053
    %v1124 = vadd.f32 %v1123, %v1057
    %v1125 = vadd.f32 %v1124, %v1061
    %v1126 = vadd.f32 %v1125, %v1065
    %v1127 = vadd.f32 %v1126, %v1069
    %v1128 = vrot.slane %v1127, 4
    %v1129 = vadd.f32 %v1127, %v1128
    %v1130 = vrot.slane %v1129, 2
    %v1131 = vadd.f32 %v1129, %v1130
    %v1132 = vrot.slane %v1131, 1
    %v1133 = vadd.f32 %v1131, %v1132
    %v1134 = vadd.f32 %v1010, %v1014
    %v1135 = vadd.f32 %v1134, %v1018
    %v1136 = vadd.f32 %v1135, %v1022
    %v1137 = vadd.f32 %v1136, %v1026
    %v1138 = vadd.f32 %v1137, %v1030
    %v1139 = vadd.f32 %v1138, %v1034
    %v1140 = vadd.f32 %v1139, %v1038
    %v1141 = vadd.f32 %v1140, %v1042
    %v1142 = vadd.f32 %v1141, %v1046
    %v1143 = vadd.f32 %v1142, %v1050
    %v1144 = vadd.f32 %v1143, %v1054
    %v1145 = vadd.f32 %v1144, %v1058
    %v1146 = vadd.f32 %v1145, %v1062
    %v1147 = vadd.f32 %v1146, %v1066
    %v1148 = vadd.f32 %v1147, %v1070
    %v1149 = vrot.slane %v1148, 4
    %v1150 = vadd.f32 %v1148, %v1149
    %v1151 = vrot.slane %v1150, 2
    %v1152 = vadd.f32 %v1150, %v1151
    %v1153 = vrot.slane %v1152, 1
    %v1154 = vadd.f32 %v1152, %v1153
    %s1155 = sld [smem:[#allocation2]]
    %v1156 = vstv %s1155
    %v1157 = vadd.f32 %v1091, %v1156
    %v1158 = vadd.f32 %v1112, %v1156
    %v1159 = vadd.f32 %v1133, %v1156
    %v1160 = vadd.f32 %v1154, %v1156
    %v1165 = vcombine.low %v1157, %v1158
    %v1166 = vcombine.low %v1159, %v1160
    %v1168 = vunpack.c.l.s4 1966171168
    %v1169 = vunpack.c.0.s8 %v1168
    %v1170 = vlaneseq
    %v1171 = vshrl.u32 %v1170, 7
    %v1172 = vsub.s32 %v1169, %v1171
    %v1173 = vrot.slane %v1165, %v1172
    %v1175 = vunpack.c.l.s4 1966171168
    %v1176 = vunpack.c.0.s8 %v1175
    %v1177 = vlaneseq
    %v1178 = vshrl.u32 %v1177, 7
    %v1179 = vsub.s32 %v1176, %v1178
    %v1180 = vrot.slane %v1166, %v1179
    %v1181 = vcombine.low %v1173, %v1180
    %v1183 = vunpack.c.l.s4 1966171168
    %v1184 = vunpack.c.0.s8 %v1183
    %v1185 = vlaneseq
    %v1186 = vshrl.u32 %v1185, 7
    %v1187 = vsub.s32 %v1184, %v1186
    %v1188 = vrot.slane %v1181, %v1187
    %v1190 = vlaneseq
    %vm1191 = vcmp.ge.s32.totalorder %v1190, 0
    %vm1192 = vcmp.lt.s32.totalorder %v1190, 512
    %vm1193 = vmand %vm1191, %vm1192
    %1194 = vst.msk [vmem:[#allocation3] sm:$0xf] %vm1193, %v1188
    // Predicated region
    $region30: #{tpu_custom_call.1} parent=1 // pred_check
      _
    $region31: #{tpu_custom_call.1} parent=1 // pred_check_branch
      %1196 = sbr.rel (0) target = $region33
    $region32: #{tpu_custom_call.1} parent=1 // pred_region
      %s1198 = ssub.s32 64, 64
      %1199 = vsyncadd [#allocation4], %s1198
      %s1201 = sshll.u32 [#allocation3], 4
      %s1202 = int_to_ptr.vmem [resolvable:$true] %s1201
      %1204 = dma.vmem_to_hbm [thread:$0]  %s1202, 64, %s7, [#allocation4]
    $region33: #{tpu_custom_call.1} parent=1 // pred_fallthru
      _
    // Predicated region
    $region34: #{tpu_custom_call.1} parent=1 // pred_check
      _
    $region35: #{tpu_custom_call.1} parent=1 // pred_check_branch
      %1206 = sbr.rel (0) target = $region37
    $region36: #{tpu_custom_call.1} parent=1 // pred_region
      %1207 = dma.done [#allocation4], 64
    $region37: #{tpu_custom_call.1} parent=1 // pred_fallthru
      _
    %1208 = vsyncpa [#allocation4], 1

</llo_original>
